<compile_context>
chip_gen: v7x
topology: tpu7x:2x2x1
jax: 0.10.0
libtpu: 0.0.40
codegen_flags: <defaults>
</compile_context>

<pallas_src>
import functools

import jax
import jax.numpy as jnp
from jax import lax
from jax.experimental import pallas as pl
from jax.experimental.pallas import tpu as pltpu

LN_EPS = 1e-5  # nn.LayerNorm default


def _round_up(n, m):
    return ((n + m - 1) // m) * m


# ----------------------------------------------------------------------------
# Kernels
# ----------------------------------------------------------------------------
def _layernorm_f32(x_f32, gamma_f32, beta_f32):
    mean = jnp.mean(x_f32, axis=-1, keepdims=True)
    centered = x_f32 - mean
    var = jnp.mean(centered * centered, axis=-1, keepdims=True)
    # gamma folded into the rsqrt scale; gamma/beta already f32 (no-op casts removed).
    return centered * (lax.rsqrt(var + LN_EPS) * gamma_f32) + beta_f32


def prenorm_resident_kernel(x_ref, gamma_ref, beta_ref, w_ref, wb_ref, o_ref):
    # x_ref: (TR, D); w_ref: (D, D_out_p) VMEM-resident bf16; o_ref: (TR, D_out_p)
    xn = _layernorm_f32(x_ref[...].astype(jnp.float32), gamma_ref[...], beta_ref[...])
    y = jnp.dot(xn.astype(jnp.bfloat16), w_ref[...],
                preferred_element_type=jnp.float32)
    o_ref[...] = (y + wb_ref[...]).astype(o_ref.dtype)


def prenorm_streamed_kernel(x_ref, gamma_ref, beta_ref, w_ref, wb_ref, o_ref, xn_ref):
    # 2-D grid (rows i outer, out-tiles j inner).  LayerNorm is computed once per
    # row tile (j == 0) and cached in a bf16 VMEM scratch reused across all j.
    @pl.when(pl.program_id(1) == 0)
    def _():
        xn = _layernorm_f32(x_ref[...].astype(jnp.float32),
                            gamma_ref[...], beta_ref[...])
        xn_ref[...] = xn.astype(xn_ref.dtype)

    y = jnp.dot(xn_ref[...], w_ref[...], preferred_element_type=jnp.float32)
    o_ref[...] = (y + wb_ref[...]).astype(o_ref.dtype)


# ----------------------------------------------------------------------------
# pallas_call builders
# ----------------------------------------------------------------------------
def _const_spec(shape, index_map, single_buffer):
    # Index-invariant block: the default second pipeline buffer is dead VMEM.
    if single_buffer:
        return pl.BlockSpec(shape, index_map, pipeline_mode=pl.Buffered(1))
    return pl.BlockSpec(shape, index_map)


def _call_resident(x2, gamma2, beta2, w_bf16, wb2, *, N, D, D_out_p, tr,
                   out_dtype, vmem_limit, single_buffer):
    grid = (pl.cdiv(N, tr),)
    return pl.pallas_call(
        prenorm_resident_kernel,
        out_shape=jax.ShapeDtypeStruct((N, D_out_p), out_dtype),
        grid_spec=pltpu.PrefetchScalarGridSpec(
            num_scalar_prefetch=0,
            grid=grid,
            in_specs=[
                pl.BlockSpec((tr, D), lambda i: (i, 0)),                      # x rows
                _const_spec((1, D), lambda i: (0, 0), single_buffer),         # gamma
                _const_spec((1, D), lambda i: (0, 0), single_buffer),         # beta
                _const_spec((D, D_out_p), lambda i: (0, 0), single_buffer),   # W resident
                _const_spec((1, D_out_p), lambda i: (0, 0), single_buffer),   # bias
            ],
            out_specs=pl.BlockSpec((tr, D_out_p), lambda i: (i, 0)),
        ),
        compiler_params=pltpu.CompilerParams(
            dimension_semantics=("parallel",),      # row tiles shard across v7x TCs
            vmem_limit_bytes=vmem_limit,
        ),
    )(x2, gamma2, beta2, w_bf16, wb2)


def _call_streamed(x2, gamma2, beta2, w_bf16, wb2, *, N, D, D_out_p, tr, tn,
                   out_dtype, vmem_limit, single_buffer):
    grid = (pl.cdiv(N, tr), D_out_p // tn)
    return pl.pallas_call(
        prenorm_streamed_kernel,
        out_shape=jax.ShapeDtypeStruct((N, D_out_p), out_dtype),
        grid_spec=pltpu.PrefetchScalarGridSpec(
            num_scalar_prefetch=0,
            grid=grid,
            in_specs=[
                pl.BlockSpec((tr, D), lambda i, j: (i, 0)),                   # x rows
                _const_spec((1, D), lambda i, j: (0, 0), single_buffer),      # gamma
                _const_spec((1, D), lambda i, j: (0, 0), single_buffer),      # beta
                pl.BlockSpec((D, tn), lambda i, j: (0, j)),                   # W out-tile
                pl.BlockSpec((1, tn), lambda i, j: (0, j)),                   # bias tile
            ],
            out_specs=pl.BlockSpec((tr, tn), lambda i, j: (i, j)),
            scratch_shapes=[pltpu.VMEM((tr, D), jnp.bfloat16)],               # xn cache
        ),
        compiler_params=pltpu.CompilerParams(
            # j-axis carries the xn scratch across output tiles -> "arbitrary".
            dimension_semantics=("parallel", "arbitrary"),
            vmem_limit_bytes=vmem_limit,
        ),
    )(x2, gamma2, beta2, w_bf16, wb2)


# ----------------------------------------------------------------------------
# Wrapper
# ----------------------------------------------------------------------------
def prenorm(x, gamma, beta, w, wb, *, tile_rows=512, tile_n=512,
            vmem_cap_bytes=48 * 1024 * 1024, force_stream=False):
    """x: (B, S, D). Returns fn(LayerNorm(x)) with fn = Linear(D, D_out).

    w: (D, D_out) stored (in, out); wb: (D_out,).
    vmem_cap_bytes defaults to 48 MiB (safe on v7x's 64 MiB physical VMEM);
    raise to ~100 MiB on v5e/v6e if larger resident weights are desired.
    """
    B, S, D = x.shape
    D_out = w.shape[1]
    N = B * S
    out_dtype = x.dtype

    # Lane-dense output: pad D_out up to a multiple of 128 (zero W cols / bias),
    # slice the padding off at the end -> unmasked vst on every generation.
    D_out_p = _round_up(D_out, 128)
    if D_out_p != D_out:
        w = jnp.pad(w, ((0, 0), (0, D_out_p - D_out)))
        wb = jnp.pad(wb, (0, D_out_p - D_out))

    x2 = x.reshape(N, D)                      # no full-array row pad (no HBM copy)
    gamma2 = gamma.reshape(1, D).astype(jnp.float32)
    beta2 = beta.reshape(1, D).astype(jnp.float32)
    w_bf16 = w.astype(jnp.bfloat16)           # cast once, outside the kernel
    wb2 = wb.reshape(1, D_out_p).astype(jnp.float32)

    xisz = x.dtype.itemsize
    oisz = jnp.dtype(out_dtype).itemsize

    # Row tile: if all rows fit one tile use the exact (possibly ragged) row count
    # as a full-extent block; otherwise a large multiple of 8 (big M-face, fewer
    # W re-streams in the fallback path).
    if N <= tile_rows:
        tr = N
    else:
        tr = _round_up(tile_rows, 8)

    def resident_bytes(tr_):
        return (2 * tr_ * D * xisz              # x tile, double-buffered
                + D * D_out_p * 2               # resident W (bf16), single copy
                + 2 * tr_ * D_out_p * oisz      # out tile, double-buffered
                + 2 * (2 * D + D_out_p) * 4)    # gamma/beta/bias

    use_resident = not force_stream
    if use_resident:
        tr_res = tr
        while tr_res > 8 and resident_bytes(tr_res) > vmem_cap_bytes:
            tr_res = max(8, _round_up(tr_res // 2, 8))
        use_resident = resident_bytes(tr_res) <= vmem_cap_bytes
        if use_resident:
            tr = tr_res

    if use_resident:
        est = resident_bytes(tr)
        vmem_limit = int(min(max(int(est * 1.4), 8 * 1024 * 1024), vmem_cap_bytes))
        run = functools.partial(
            _call_resident, x2, gamma2, beta2, w_bf16, wb2,
            N=N, D=D, D_out_p=D_out_p, tr=tr,
            out_dtype=out_dtype, vmem_limit=vmem_limit)
    else:
        # Streamed-W fallback: lane-dense divisor of D_out_p for the out tile.
        # TODO(synk): for huge D with small D_out_p/tn, a transposed (j outer,
        # i inner) loop that re-streams x instead of W can be cheaper.
        tn = min(_round_up(tile_n, 128), D_out_p)
        while D_out_p % tn != 0:
            tn -= 128

        def streamed_bytes(tr_, tn_):
            return (2 * tr_ * D * xisz          # x tile
                    + 2 * D * tn_ * 2           # W tile (bf16)
                    + 2 * tr_ * tn_ * oisz      # out tile
                    + 2 * (2 * D + tn_) * 4     # gamma/beta/bias
                    + tr_ * D * 2)              # xn scratch (bf16)

        while tr > 8 and streamed_bytes(tr, tn) > vmem_cap_bytes:
            tr = max(8, _round_up(tr // 2, 8))
        est = streamed_bytes(tr, tn)
        vmem_limit = int(min(max(int(est * 1.4), 8 * 1024 * 1024), vmem_cap_bytes))
        run = functools.partial(
            _call_streamed, x2, gamma2, beta2, w_bf16, wb2,
            N=N, D=D, D_out_p=D_out_p, tr=tr, tn=tn,
            out_dtype=out_dtype, vmem_limit=vmem_limit)

    try:
        out = jax.block_until_ready(run(single_buffer=True))
    except Exception:
        # Older jax without BlockSpec(pipeline_mode=...) support.
        out = jax.block_until_ready(run(single_buffer=False))

    return out[:, :D_out].reshape(B, S, D_out)


def prenorm_ref(x, gamma, beta, w, wb):
    """Pure-JAX reference mirroring torch: fn(nn.LayerNorm(dim)(x)), f32 matmul."""
    mean = jnp.mean(x, axis=-1, keepdims=True)
    var = jnp.mean((x - mean) ** 2, axis=-1, keepdims=True)
    xn = (x - mean) / jnp.sqrt(var + LN_EPS)
    xn = xn * gamma + beta
    return jnp.einsum("bsd,de->bse", xn, w) + wb


if __name__ == "__main__":
    B, S, D = 2, 8, 128
    key = jax.random.PRNGKey(0)
    kx, kg, kb, kw, kwb, kw2, kwb2 = jax.random.split(key, 7)

    x = jax.random.normal(kx, (B, S, D), dtype=jnp.float32)
    gamma = 1.0 + 0.1 * jax.random.normal(kg, (D,), dtype=jnp.float32)
    beta = 0.1 * jax.random.normal(kb, (D,), dtype=jnp.float32)
    w = jax.random.normal(kw, (D, D), dtype=jnp.float32) / jnp.sqrt(D)
    wb = 0.1 * jax.random.normal(kwb, (D,), dtype=jnp.float32)

    # 1) Resident-W fast path (the common case).
    y = jax.block_until_ready(prenorm(x, gamma, beta, w, wb))
    y_ref = prenorm_ref(x, gamma, beta, w, wb)
    # bf16 matmul operands (f32 accumulate) -> looser tolerance vs f32 reference.
    assert jnp.allclose(y, y_ref, atol=3e-2, rtol=3e-2), "resident mismatch"

    # 2) Ragged rows (B*S not a multiple of 8), no wrapper-side padding copy.
    x_r = jax.random.normal(kx, (2, 9, D), dtype=jnp.float32)
    y_r = jax.block_until_ready(prenorm(x_r, gamma, beta, w, wb))
    assert jnp.allclose(y_r, prenorm_ref(x_r, gamma, beta, w, wb),
                        atol=3e-2, rtol=3e-2), "ragged mismatch"

    # 3) Streamed-W fallback path, with a non-128-multiple D_out (exercises the
    #    lane-dense output padding and the xn-scratch reuse across out tiles).
    D_out2 = 192
    w2 = jax.random.normal(kw2, (D, D_out2), dtype=jnp.float32) / jnp.sqrt(D)
    wb2 = 0.1 * jax.random.normal(kwb2, (D_out2,), dtype=jnp.float32)
    y_s = jax.block_until_ready(
        prenorm(x, gamma, beta, w2, wb2, tile_n=128, force_stream=True))
    assert jnp.allclose(y_s, prenorm_ref(x, gamma, beta, w2, wb2),
                        atol=3e-2, rtol=3e-2), "streamed mismatch"

    print("KERNEL_OK")
</pallas_src>

<mosaic_0001>
module attributes {stable_mosaic.version = 11 : i64} {
  func.func @prenorm_resident_kernel(%arg0: i32, %arg1: memref<16x128xf32, #tpu.memory_space<vmem>>, %arg2: memref<1x128xf32, #tpu.memory_space<vmem>>, %arg3: memref<1x128xf32, #tpu.memory_space<vmem>>, %arg4: memref<128x128xbf16, #tpu.memory_space<vmem>>, %arg5: memref<1x128xf32, #tpu.memory_space<vmem>>, %arg6: memref<16x128xf32, #tpu.memory_space<vmem>>) attributes {dimension_semantics = [#tpu.dimension_semantics<parallel>], iteration_bounds = array<i64: 1>, scalar_prefetch = 0 : i64, scratch_operands = 0 : i64, tpu.core_type = #tpu.core_type<tc>, window_params = [{transform_indices = @transform_0, window_bounds = array<i64: 16, 128>}, {pipeline_mode = #tpu.pipeline_mode<synchronous>, transform_indices = @transform_1, window_bounds = array<i64: 1, 128>}, {pipeline_mode = #tpu.pipeline_mode<synchronous>, transform_indices = @transform_2, window_bounds = array<i64: 1, 128>}, {pipeline_mode = #tpu.pipeline_mode<synchronous>, transform_indices = @transform_3, window_bounds = array<i64: 128, 128>}, {pipeline_mode = #tpu.pipeline_mode<synchronous>, transform_indices = @transform_4, window_bounds = array<i64: 1, 128>}, {transform_indices = @transform_5, window_bounds = array<i64: 16, 128>}]} {
    %c0 = arith.constant 0 : index
    %c0_0 = arith.constant 0 : index
    %0 = vector.load %arg1[%c0, %c0_0] : memref<16x128xf32, #tpu.memory_space<vmem>>, vector<16x128xf32>
    %c0_1 = arith.constant 0 : index
    %c0_2 = arith.constant 0 : index
    %1 = vector.load %arg2[%c0_1, %c0_2] : memref<1x128xf32, #tpu.memory_space<vmem>>, vector<1x128xf32>
    %c0_3 = arith.constant 0 : index
    %c0_4 = arith.constant 0 : index
    %2 = vector.load %arg3[%c0_3, %c0_4] : memref<1x128xf32, #tpu.memory_space<vmem>>, vector<1x128xf32>
    %cst = arith.constant dense<0.000000e+00> : vector<16xf32>
    %3 = vector.multi_reduction <add>, %0, %cst [1] : vector<16x128xf32> to vector<16xf32>
    %4 = vector.shape_cast %3 : vector<16xf32> to vector<16x1xf32>
    %cst_5 = arith.constant 1.280000e+02 : f32
    %5 = vector.broadcast %cst_5 : f32 to vector<16x1xf32>
    %6 = arith.divf %4, %5 : vector<16x1xf32>
    %7 = vector.broadcast %6 : vector<16x1xf32> to vector<16x128xf32>
    %8 = arith.subf %0, %7 : vector<16x128xf32>
    %9 = arith.mulf %8, %8 : vector<16x128xf32>
    %cst_6 = arith.constant dense<0.000000e+00> : vector<16xf32>
    %10 = vector.multi_reduction <add>, %9, %cst_6 [1] : vector<16x128xf32> to vector<16xf32>
    %11 = vector.shape_cast %10 : vector<16xf32> to vector<16x1xf32>
    %cst_7 = arith.constant 1.280000e+02 : f32
    %12 = vector.broadcast %cst_7 : f32 to vector<16x1xf32>
    %13 = arith.divf %11, %12 : vector<16x1xf32>
    %cst_8 = arith.constant 9.99999974E-6 : f32
    %14 = vector.broadcast %cst_8 : f32 to vector<16x1xf32>
    %15 = arith.addf %13, %14 : vector<16x1xf32>
    %16 = math.rsqrt %15 : vector<16x1xf32>
    %17 = vector.broadcast %16 : vector<16x1xf32> to vector<16x128xf32>
    %18 = vector.broadcast %1 : vector<1x128xf32> to vector<16x128xf32>
    %19 = arith.mulf %17, %18 : vector<16x128xf32>
    %20 = arith.mulf %8, %19 : vector<16x128xf32>
    %21 = vector.broadcast %2 : vector<1x128xf32> to vector<16x128xf32>
    %22 = arith.addf %20, %21 : vector<16x128xf32>
    %23 = arith.truncf %22 : vector<16x128xf32> to vector<16x128xbf16>
    %c0_9 = arith.constant 0 : index
    %c0_10 = arith.constant 0 : index
    %24 = vector.load %arg4[%c0_9, %c0_10] : memref<128x128xbf16, #tpu.memory_space<vmem>>, vector<128x128xbf16>
    %cst_11 = arith.constant dense<0.000000e+00> : vector<16x128xf32>
    %25 = tpu.matmul %23, %24, %cst_11 {dimension_numbers = #tpu.dot_dimension_numbers<[1], [0], [0], [1], [0, 0, 1, 1], [], []>} : vector<16x128xbf16>, vector<128x128xbf16>, vector<16x128xf32> -> vector<16x128xf32>
    %c0_12 = arith.constant 0 : index
    %c0_13 = arith.constant 0 : index
    %26 = vector.load %arg5[%c0_12, %c0_13] : memref<1x128xf32, #tpu.memory_space<vmem>>, vector<1x128xf32>
    %27 = vector.broadcast %26 : vector<1x128xf32> to vector<16x128xf32>
    %28 = arith.addf %25, %27 : vector<16x128xf32>
    %c0_14 = arith.constant 0 : index
    %c0_15 = arith.constant 0 : index
    %29 = vector.load %arg6[%c0_14, %c0_15] : memref<16x128xf32, #tpu.memory_space<vmem>>, vector<16x128xf32>
    tpu.vector_store %arg6[%c0_14, %c0_15], %28 {strides = array<i32>} : memref<16x128xf32, #tpu.memory_space<vmem>>, vector<16x128xf32>,
    return
  }
  func.func @transform_0(%arg0: i32) -> (i32, i32) {
    %c0_i32 = arith.constant 0 : i32
    %c0_i32_0 = arith.constant 0 : i32
    return %arg0, %c0_i32 : i32, i32
  }
  func.func @transform_1(%arg0: i32) -> (i32, i32) {
    %c0_i32 = arith.constant 0 : i32
    %c0_i32_0 = arith.constant 0 : i32
    %c0_i32_1 = arith.constant 0 : i32
    return %c0_i32, %c0_i32_0 : i32, i32
  }
  func.func @transform_2(%arg0: i32) -> (i32, i32) {
    %c0_i32 = arith.constant 0 : i32
    %c0_i32_0 = arith.constant 0 : i32
    %c0_i32_1 = arith.constant 0 : i32
    return %c0_i32, %c0_i32_0 : i32, i32
  }
  func.func @transform_3(%arg0: i32) -> (i32, i32) {
    %c0_i32 = arith.constant 0 : i32
    %c0_i32_0 = arith.constant 0 : i32
    %c0_i32_1 = arith.constant 0 : i32
    return %c0_i32, %c0_i32_0 : i32, i32
  }
  func.func @transform_4(%arg0: i32) -> (i32, i32) {
    %c0_i32 = arith.constant 0 : i32
    %c0_i32_0 = arith.constant 0 : i32
    %c0_i32_1 = arith.constant 0 : i32
    return %c0_i32, %c0_i32_0 : i32, i32
  }
  func.func @transform_5(%arg0: i32) -> (i32, i32) {
    %c0_i32 = arith.constant 0 : i32
    %c0_i32_0 = arith.constant 0 : i32
    return %arg0, %c0_i32 : i32, i32
  }
}

module attributes {stable_mosaic.version = 11 : i64} {
  func.func @prenorm_resident_kernel(%arg0: i32, %arg1: memref<16x128xf32, #tpu.memory_space<vmem>>, %arg2: memref<1x128xf32, #tpu.memory_space<vmem>>, %arg3: memref<1x128xf32, #tpu.memory_space<vmem>>, %arg4: memref<128x128xbf16, #tpu.memory_space<vmem>>, %arg5: memref<1x128xf32, #tpu.memory_space<vmem>>, %arg6: memref<16x128xf32, #tpu.memory_space<vmem>>) attributes {dimension_semantics = [#tpu.dimension_semantics<parallel>], iteration_bounds = array<i64: 1>, scalar_prefetch = 0 : i64, scratch_operands = 0 : i64, tpu.core_type = #tpu.core_type<tc>, window_params = [{transform_indices = @transform_0, window_bounds = array<i64: 16, 128>}, {pipeline_mode = #tpu.pipeline_mode<synchronous>, transform_indices = @transform_1, window_bounds = array<i64: 1, 128>}, {pipeline_mode = #tpu.pipeline_mode<synchronous>, transform_indices = @transform_2, window_bounds = array<i64: 1, 128>}, {pipeline_mode = #tpu.pipeline_mode<synchronous>, transform_indices = @transform_3, window_bounds = array<i64: 128, 128>}, {pipeline_mode = #tpu.pipeline_mode<synchronous>, transform_indices = @transform_4, window_bounds = array<i64: 1, 128>}, {transform_indices = @transform_5, window_bounds = array<i64: 16, 128>}]} {
    %c0 = arith.constant 0 : index
    %c0_0 = arith.constant 0 : index
    %0 = vector.load %arg1[%c0, %c0_0] : memref<16x128xf32, #tpu.memory_space<vmem>>, vector<16x128xf32>
    %c0_1 = arith.constant 0 : index
    %c0_2 = arith.constant 0 : index
    %1 = vector.load %arg2[%c0_1, %c0_2] : memref<1x128xf32, #tpu.memory_space<vmem>>, vector<1x128xf32>
    %c0_3 = arith.constant 0 : index
    %c0_4 = arith.constant 0 : index
    %2 = vector.load %arg3[%c0_3, %c0_4] : memref<1x128xf32, #tpu.memory_space<vmem>>, vector<1x128xf32>
    %cst = arith.constant dense<0.000000e+00> : vector<16xf32>
    %3 = vector.multi_reduction <add>, %0, %cst [1] : vector<16x128xf32> to vector<16xf32>
    %4 = vector.shape_cast %3 : vector<16xf32> to vector<16x1xf32>
    %cst_5 = arith.constant 1.280000e+02 : f32
    %5 = vector.broadcast %cst_5 : f32 to vector<16x1xf32>
    %6 = arith.divf %4, %5 : vector<16x1xf32>
    %7 = vector.broadcast %6 : vector<16x1xf32> to vector<16x128xf32>
    %8 = arith.subf %0, %7 : vector<16x128xf32>
    %9 = arith.mulf %8, %8 : vector<16x128xf32>
    %cst_6 = arith.constant dense<0.000000e+00> : vector<16xf32>
    %10 = vector.multi_reduction <add>, %9, %cst_6 [1] : vector<16x128xf32> to vector<16xf32>
    %11 = vector.shape_cast %10 : vector<16xf32> to vector<16x1xf32>
    %cst_7 = arith.constant 1.280000e+02 : f32
    %12 = vector.broadcast %cst_7 : f32 to vector<16x1xf32>
    %13 = arith.divf %11, %12 : vector<16x1xf32>
    %cst_8 = arith.constant 9.99999974E-6 : f32
    %14 = vector.broadcast %cst_8 : f32 to vector<16x1xf32>
    %15 = arith.addf %13, %14 : vector<16x1xf32>
    %16 = math.rsqrt %15 : vector<16x1xf32>
    %17 = vector.broadcast %16 : vector<16x1xf32> to vector<16x128xf32>
    %18 = vector.broadcast %1 : vector<1x128xf32> to vector<16x128xf32>
    %19 = arith.mulf %17, %18 : vector<16x128xf32>
    %20 = arith.mulf %8, %19 : vector<16x128xf32>
    %21 = vector.broadcast %2 : vector<1x128xf32> to vector<16x128xf32>
    %22 = arith.addf %20, %21 : vector<16x128xf32>
    %23 = arith.truncf %22 : vector<16x128xf32> to vector<16x128xbf16>
    %c0_9 = arith.constant 0 : index
    %c0_10 = arith.constant 0 : index
    %24 = vector.load %arg4[%c0_9, %c0_10] : memref<128x128xbf16, #tpu.memory_space<vmem>>, vector<128x128xbf16>
    %cst_11 = arith.constant dense<0.000000e+00> : vector<16x128xf32>
    %25 = tpu.matmul %23, %24, %cst_11 {dimension_numbers = #tpu.dot_dimension_numbers<[1], [0], [0], [1], [0, 0, 1, 1], [], []>} : vector<16x128xbf16>, vector<128x128xbf16>, vector<16x128xf32> -> vector<16x128xf32>
    %c0_12 = arith.constant 0 : index
    %c0_13 = arith.constant 0 : index
    %26 = vector.load %arg5[%c0_12, %c0_13] : memref<1x128xf32, #tpu.memory_space<vmem>>, vector<1x128xf32>
    %27 = vector.broadcast %26 : vector<1x128xf32> to vector<16x128xf32>
    %28 = arith.addf %25, %27 : vector<16x128xf32>
    %c0_14 = arith.constant 0 : index
    %c0_15 = arith.constant 0 : index
    %29 = vector.load %arg6[%c0_14, %c0_15] : memref<16x128xf32, #tpu.memory_space<vmem>>, vector<16x128xf32>
    tpu.vector_store %arg6[%c0_14, %c0_15], %28 {strides = array<i32>} : memref<16x128xf32, #tpu.memory_space<vmem>>, vector<16x128xf32>,
    return
  }
  func.func @transform_0(%arg0: i32) -> (i32, i32) {
    %c0_i32 = arith.constant 0 : i32
    %c0_i32_0 = arith.constant 0 : i32
    return %arg0, %c0_i32 : i32, i32
  }
  func.func @transform_1(%arg0: i32) -> (i32, i32) {
    %c0_i32 = arith.constant 0 : i32
    %c0_i32_0 = arith.constant 0 : i32
    %c0_i32_1 = arith.constant 0 : i32
    return %c0_i32, %c0_i32_0 : i32, i32
  }
  func.func @transform_2(%arg0: i32) -> (i32, i32) {
    %c0_i32 = arith.constant 0 : i32
    %c0_i32_0 = arith.constant 0 : i32
    %c0_i32_1 = arith.constant 0 : i32
    return %c0_i32, %c0_i32_0 : i32, i32
  }
  func.func @transform_3(%arg0: i32) -> (i32, i32) {
    %c0_i32 = arith.constant 0 : i32
    %c0_i32_0 = arith.constant 0 : i32
    %c0_i32_1 = arith.constant 0 : i32
    return %c0_i32, %c0_i32_0 : i32, i32
  }
  func.func @transform_4(%arg0: i32) -> (i32, i32) {
    %c0_i32 = arith.constant 0 : i32
    %c0_i32_0 = arith.constant 0 : i32
    %c0_i32_1 = arith.constant 0 : i32
    return %c0_i32, %c0_i32_0 : i32, i32
  }
  func.func @transform_5(%arg0: i32) -> (i32, i32) {
    %c0_i32 = arith.constant 0 : i32
    %c0_i32_0 = arith.constant 0 : i32
    return %arg0, %c0_i32 : i32, i32
  }
}

</mosaic_0001>

<llo_original>
// kernel: tpu_custom_call.1
$region0: #{tpu_custom_call.1}
  #allocation0 [shape = 'u32[]', space=smem, size = 0x4, offset = 0x4, fixed_abs, tag = 'smem constant byte address 0x4 - core index']
  #allocation1 [shape = 'u32[144,128]{1,0:T(1,128)}', space=vmem, size = 0x12000, scoped, tag = 'internal scratch']
  %s0 = inlined_call_operand.hbm [shape: f32[16,128], index: 0, kind: input, shape index: {}]
  %s1 = inlined_call_operand.vmem [shape: f32[1,128], index: 1, kind: input, shape index: {}]
  %s2 = inlined_call_operand.vmem [shape: f32[1,128], index: 2, kind: input, shape index: {}]
  %s3 = inlined_call_operand.hbm [shape: bf16[128,128], index: 3, kind: input, shape index: {}]
  %s4 = inlined_call_operand.vmem [shape: f32[1,128], index: 4, kind: input, shape index: {}]
  %s5 = inlined_call_operand.hbm [shape: f32[16,128], index: 5, kind: output, shape index: {}]
  %s6 = sld [smem:[#allocation0]]
  $region38: #{tpu_custom_call.1} parent=0
    _
  %s8 = ssub.s32 1, %s6
  %s9 = scalar_select 0, %s8, %s6
  $region1: #{tpu_custom_call.1} parent=0
    #allocation2 [shape = 'u8[8192]{0}', space=vmem, size = 0x2000, scoped, tag = 'input window, operand 0, single buffered']
    #allocation3 [shape = 's32[1]{0}', space=sflag, size = 0x4, scoped, tag = 'scoped memory for tpu_custom_call.1']
    #allocation4 [shape = 's32[1]{0}', space=sflag, size = 0x4, scoped, tag = 'scoped memory for tpu_custom_call.1']
    #allocation5 [shape = 'u8[32768]{0}', space=vmem, size = 0x8000, scoped, tag = 'input window, operand 3, single buffered']
    #allocation6 [shape = 's32[1]{0}', space=sflag, size = 0x4, scoped, tag = 'scoped memory for tpu_custom_call.1']
    #allocation7 [shape = 'u8[8192]{0}', space=vmem, size = 0x2000, scoped, tag = 'output window, operand 0, single buffered']
    %10 = vsyncpa [#allocation3], 0
    %11 = vsyncpa [#allocation6], 0
    %12 = vsyncpa [#allocation4], 0
    // Predicated region
    $region2: #{tpu_custom_call.1} parent=1 // pred_check
      _
    $region3: #{tpu_custom_call.1} parent=1 // pred_check_branch
      %14 = sbr.rel (0) target = $region5
    $region4: #{tpu_custom_call.1} parent=1 // pred_region
      %s16 = ssub.s32 256, 256
      %17 = vsyncadd [#allocation3], %s16
      %s18 = sshll.u32 [#allocation2], 4
      %s19 = int_to_ptr.vmem [resolvable:$true] %s18
      %24 = dma.hbm_to_vmem [thread:$0]  %s0, 256, %s19, [#allocation3], 128, 128, 8
    $region5: #{tpu_custom_call.1} parent=1 // pred_fallthru
      _
    // Predicated region
    $region6: #{tpu_custom_call.1} parent=1 // pred_check
      _
    $region7: #{tpu_custom_call.1} parent=1 // pred_check_branch
      %26 = sbr.rel (0) target = $region9
    $region8: #{tpu_custom_call.1} parent=1 // pred_region
      _
    $region9: #{tpu_custom_call.1} parent=1 // pred_fallthru
      _
    // Predicated region
    $region10: #{tpu_custom_call.1} parent=1 // pred_check
      _
    $region11: #{tpu_custom_call.1} parent=1 // pred_check_branch
      %28 = sbr.rel (0) target = $region13
    $region12: #{tpu_custom_call.1} parent=1 // pred_region
      _
    $region13: #{tpu_custom_call.1} parent=1 // pred_fallthru
      _
    // Predicated region
    $region14: #{tpu_custom_call.1} parent=1 // pred_check
      _
    $region15: #{tpu_custom_call.1} parent=1 // pred_check_branch
      %30 = sbr.rel (0) target = $region17
    $region16: #{tpu_custom_call.1} parent=1 // pred_region
      %s32 = ssub.s32 1024, 1024
      %33 = vsyncadd [#allocation6], %s32
      %s34 = sshll.u32 [#allocation5], 4
      %s35 = int_to_ptr.vmem [resolvable:$true] %s34
      %40 = dma.hbm_to_vmem [thread:$0]  %s3, 1024, %s35, [#allocation6], 64, 64, 4
    $region17: #{tpu_custom_call.1} parent=1 // pred_fallthru
      _
    // Predicated region
    $region18: #{tpu_custom_call.1} parent=1 // pred_check
      _
    $region19: #{tpu_custom_call.1} parent=1 // pred_check_branch
      %42 = sbr.rel (0) target = $region21
    $region20: #{tpu_custom_call.1} parent=1 // pred_region
      _
    $region21: #{tpu_custom_call.1} parent=1 // pred_fallthru
      _
    // Predicated region
    $region22: #{tpu_custom_call.1} parent=1 // pred_check
      _
    $region23: #{tpu_custom_call.1} parent=1 // pred_check_branch
      %44 = sbr.rel (0) target = $region25
    $region24: #{tpu_custom_call.1} parent=1 // pred_region
      %45 = dma.done [#allocation3], 256
    $region25: #{tpu_custom_call.1} parent=1 // pred_fallthru
      _
    // Predicated region
    $region26: #{tpu_custom_call.1} parent=1 // pred_check
      _
    $region27: #{tpu_custom_call.1} parent=1 // pred_check_branch
      %47 = sbr.rel (0) target = $region29
    $region28: #{tpu_custom_call.1} parent=1 // pred_region
      %48 = dma.done [#allocation6], 1024
    $region29: #{tpu_custom_call.1} parent=1 // pred_fallthru
      _
    %v50 = vld [vmem:[#allocation2] sm:$0xff]
    %v51 = vld [vmem:[#allocation2 + $0x8] sm:$0xff]
    %v52 = vld [vmem:[%s1] sm:$0x1]
    %v53 = vld [vmem:[%s2] sm:$0x1]
    %54 = vadd.xlane.f32.xlu0 %v50
    %v55 = vpop.xlane.xlu0 %54
    %56 = vadd.xlane.f32.xlu0 %v51
    %v57 = vpop.xlane.xlu0 %56
    %v58 = vrcp.pop 128.0
    %v59 = vmul.f32 %v55, %v58
    %v60 = vmul.f32 %v57, %v58
    %v61 = vsub.f32 %v50, %v59
    %v62 = vsub.f32 %v51, %v60
    %v63 = vmul.f32 %v61, %v61
    %v64 = vmul.f32 %v62, %v62
    %65 = vadd.xlane.f32.xlu0 %v63
    %v66 = vpop.xlane.xlu0 %65
    %67 = vadd.xlane.f32.xlu0 %v64
    %v68 = vpop.xlane.xlu0 %67
    %v69 = vmul.f32 %v66, %v58
    %v70 = vmul.f32 %v68, %v58
    %v71 = vadd.f32 %v69, 1e-05
    %v72 = vadd.f32 %v70, 1e-05
    %v73 = vrsqrt.pop %v71
    %v74 = vrsqrt.pop %v72
    %v76 = vlaneseq
    %v77 = vshrl.u32 %v76, 7
    %v78 = vsub.s32 0, %v77
    %v79 = vrot.slane %v52, %v78
    %v81 = vmul.f32 %v73, %v79
    %v82 = vmul.f32 %v74, %v79
    %v83 = vmul.f32 %v61, %v81
    %v84 = vmul.f32 %v62, %v82
    %v86 = vlaneseq
    %v87 = vshrl.u32 %v86, 7
    %v88 = vsub.s32 0, %v87
    %v89 = vrot.slane %v53, %v88
    %v91 = vadd.f32 %v83, %v89
    %v92 = vadd.f32 %v84, %v89
    %v93 = vpack.c.bf16 %v92, %v91
    %v94 = vld [vmem:[#allocation5] sm:$0xf]
    %v95 = vld [vmem:[#allocation5 + $0x4] sm:$0xf]
    %v96 = vld [vmem:[#allocation5 + $0x8] sm:$0xf]
    %v97 = vld [vmem:[#allocation5 + $0xc] sm:$0xf]
    %v98 = vld [vmem:[#allocation5 + $0x10] sm:$0xf]
    %v99 = vld [vmem:[#allocation5 + $0x14] sm:$0xf]
    %v100 = vld [vmem:[#allocation5 + $0x18] sm:$0xf]
    %v101 = vld [vmem:[#allocation5 + $0x1c] sm:$0xf]
    %v102 = vld [vmem:[#allocation5 + $0x20] sm:$0xf]
    %v103 = vld [vmem:[#allocation5 + $0x24] sm:$0xf]
    %v104 = vld [vmem:[#allocation5 + $0x28] sm:$0xf]
    %v105 = vld [vmem:[#allocation5 + $0x2c] sm:$0xf]
    %v106 = vld [vmem:[#allocation5 + $0x30] sm:$0xf]
    %v107 = vld [vmem:[#allocation5 + $0x34] sm:$0xf]
    %v108 = vld [vmem:[#allocation5 + $0x38] sm:$0xf]
    %v109 = vld [vmem:[#allocation5 + $0x3c] sm:$0xf]
    %v110 = vld [vmem:[%s4] sm:$0x1]
    %v112 = vlaneseq
    %v113 = vshrl.u32 %v112, 7
    %v114 = vsub.s32 0, %v113
    %v115 = vrot.slane %v110, %v114
    %v133 = vunpack.c.l.b16 %v94
    %v134 = vunpack.c.l.b16 %v95
    %v135 = vunpack.c.l.b16 %v96
    %v136 = vunpack.c.l.b16 %v97
    %v137 = vunpack.c.l.b16 %v98
    %v138 = vunpack.c.l.b16 %v99
    %v139 = vunpack.c.l.b16 %v100
    %v140 = vunpack.c.l.b16 %v101
    %v141 = vunpack.c.l.b16 %v102
    %v142 = vunpack.c.l.b16 %v103
    %v143 = vunpack.c.l.b16 %v104
    %v144 = vunpack.c.l.b16 %v105
    %v145 = vunpack.c.l.b16 %v106
    %v146 = vunpack.c.l.b16 %v107
    %v147 = vunpack.c.l.b16 %v108
    %v148 = vunpack.c.l.b16 %v109
    %v149 = vpack.c.b16 %v134, %v133
    %v150 = vpack.c.b16 %v136, %v135
    %v151 = vpack.c.b16 %v138, %v137
    %v152 = vpack.c.b16 %v140, %v139
    %v153 = vpack.c.b16 %v142, %v141
    %v154 = vpack.c.b16 %v144, %v143
    %v155 = vpack.c.b16 %v146, %v145
    %v156 = vpack.c.b16 %v148, %v147
    %165 = vmatprep.subr.bf16.mxu0 0
    %166 = vmatpush1.bf16.msra.mxu0 %v149
    %167 = vmatprep.subr.bf16.mxu0 0
    %168 = vmatpush1.bf16.msra.mxu0 %v150
    %169 = vmatprep.subr.bf16.mxu0 0
    %170 = vmatpush1.bf16.msra.mxu0 %v151
    %171 = vmatprep.subr.bf16.mxu0 0
    %172 = vmatpush1.bf16.msra.mxu0 %v152
    %173 = vmatprep.subr.bf16.mxu0 0
    %174 = vmatpush1.bf16.msra.mxu0 %v153
    %175 = vmatprep.subr.bf16.mxu0 0
    %176 = vmatpush1.bf16.msra.mxu0 %v154
    %177 = vmatprep.subr.bf16.mxu0 0
    %178 = vmatpush1.bf16.msra.mxu0 %v155
    %179 = vmatprep.subr.bf16.mxu0 0
    %180 = vmatpush1.bf16.msra.mxu0 %v156
    %181 = vmatprep.subr.bf16.mxu0 0
    %182 = vmatpush1.bf16.msra.mxu0 0
    %183 = vmatprep.subr.bf16.mxu0 0
    %184 = vmatpush1.bf16.msra.mxu0 0
    %185 = vmatprep.subr.bf16.mxu0 0
    %186 = vmatpush1.bf16.msra.mxu0 0
    %187 = vmatprep.subr.bf16.mxu0 0
    %188 = vmatpush1.bf16.msra.mxu0 0
    %189 = vmatprep.subr.bf16.mxu0 0
    %190 = vmatpush1.bf16.msra.mxu0 0
    %191 = vmatprep.subr.bf16.mxu0 0
    %192 = vmatpush1.bf16.msra.mxu0 0
    %193 = vmatprep.subr.bf16.mxu0 0
    %194 = vmatpush1.bf16.msra.mxu0 0
    %195 = vmatprep.subr.bf16.mxu0 0
    %196 = vmatpush1.bf16.msra.mxu0 0
    %197 = vmatprep.mubr.bf16.mxu0 0
    %198 = vmatmul.mubr.bf16.gmra.mrb[0].mxu0 %v93
    %v199 = vpop.f32.mrb[0].mxu0
    %v200 = vadd.f32 %v115, %v199
    %v201 = vpop.f32.mrb[0].mxu0
    %v202 = vpop.f32.mrb[0].mxu0
    %v203 = vadd.f32 %v115, %v202
    %v204 = vpop.f32.mrb[0].mxu0
    %205 = vdwg.mxu0
    %206 = vst [vmem:[#allocation7] sm:$0xff] %v200
    %207 = vst [vmem:[#allocation7 + $0x8] sm:$0xff] %v203
    // Predicated region
    $region30: #{tpu_custom_call.1} parent=1 // pred_check
      _
    $region31: #{tpu_custom_call.1} parent=1 // pred_check_branch
      %209 = sbr.rel (0) target = $region33
    $region32: #{tpu_custom_call.1} parent=1 // pred_region
      %s211 = ssub.s32 256, 256
      %212 = vsyncadd [#allocation4], %s211
      %s213 = sshll.u32 [#allocation7], 4
      %s214 = int_to_ptr.vmem [resolvable:$true] %s213
      %219 = dma.vmem_to_hbm [thread:$0]  %s214, 256, %s5, [#allocation4], 128, 128, 8
    $region33: #{tpu_custom_call.1} parent=1 // pred_fallthru
      _
    // Predicated region
    $region34: #{tpu_custom_call.1} parent=1 // pred_check
      _
    $region35: #{tpu_custom_call.1} parent=1 // pred_check_branch
      %221 = sbr.rel (0) target = $region37
    $region36: #{tpu_custom_call.1} parent=1 // pred_region
      %222 = dma.done [#allocation4], 256
    $region37: #{tpu_custom_call.1} parent=1 // pred_fallthru
      _
    %223 = vsyncpa [#allocation3], 1
    %224 = vsyncpa [#allocation6], 1
    %225 = vsyncpa [#allocation4], 1

// kernel: tpu_custom_call.1
$region0: #{tpu_custom_call.1}
  #allocation0 [shape = 'u32[]', space=smem, size = 0x4, offset = 0x4, fixed_abs, tag = 'smem constant byte address 0x4 - core index']
  #allocation1 [shape = 'u32[144,128]{1,0:T(1,128)}', space=vmem, size = 0x12000, scoped, tag = 'internal scratch']
  %s0 = inlined_call_operand.hbm [shape: f32[16,128], index: 0, kind: input, shape index: {}]
  %s1 = inlined_call_operand.vmem [shape: f32[1,128], index: 1, kind: input, shape index: {}]
  %s2 = inlined_call_operand.vmem [shape: f32[1,128], index: 2, kind: input, shape index: {}]
  %s3 = inlined_call_operand.hbm [shape: bf16[128,128], index: 3, kind: input, shape index: {}]
  %s4 = inlined_call_operand.vmem [shape: f32[1,128], index: 4, kind: input, shape index: {}]
  %s5 = inlined_call_operand.hbm [shape: f32[16,128], index: 5, kind: output, shape index: {}]
  %s6 = sld [smem:[#allocation0]]
  $region38: #{tpu_custom_call.1} parent=0
    _
  %s8 = ssub.s32 1, %s6
  %s9 = scalar_select 0, %s8, %s6
  $region1: #{tpu_custom_call.1} parent=0
    #allocation2 [shape = 'u8[8192]{0}', space=vmem, size = 0x2000, scoped, tag = 'input window, operand 0, single buffered']
    #allocation3 [shape = 's32[1]{0}', space=sflag, size = 0x4, scoped, tag = 'scoped memory for tpu_custom_call.1']
    #allocation4 [shape = 's32[1]{0}', space=sflag, size = 0x4, scoped, tag = 'scoped memory for tpu_custom_call.1']
    #allocation5 [shape = 'u8[32768]{0}', space=vmem, size = 0x8000, scoped, tag = 'input window, operand 3, single buffered']
    #allocation6 [shape = 's32[1]{0}', space=sflag, size = 0x4, scoped, tag = 'scoped memory for tpu_custom_call.1']
    #allocation7 [shape = 'u8[8192]{0}', space=vmem, size = 0x2000, scoped, tag = 'output window, operand 0, single buffered']
    %10 = vsyncpa [#allocation3], 0
    %11 = vsyncpa [#allocation6], 0
    %12 = vsyncpa [#allocation4], 0
    // Predicated region
    $region2: #{tpu_custom_call.1} parent=1 // pred_check
      _
    $region3: #{tpu_custom_call.1} parent=1 // pred_check_branch
      %14 = sbr.rel (0) target = $region5
    $region4: #{tpu_custom_call.1} parent=1 // pred_region
      %s16 = ssub.s32 256, 256
      %17 = vsyncadd [#allocation3], %s16
      %s18 = sshll.u32 [#allocation2], 4
      %s19 = int_to_ptr.vmem [resolvable:$true] %s18
      %24 = dma.hbm_to_vmem [thread:$0]  %s0, 256, %s19, [#allocation3], 128, 128, 8
    $region5: #{tpu_custom_call.1} parent=1 // pred_fallthru
      _
    // Predicated region
    $region6: #{tpu_custom_call.1} parent=1 // pred_check
      _
    $region7: #{tpu_custom_call.1} parent=1 // pred_check_branch
      %26 = sbr.rel (0) target = $region9
    $region8: #{tpu_custom_call.1} parent=1 // pred_region
      _
    $region9: #{tpu_custom_call.1} parent=1 // pred_fallthru
      _
    // Predicated region
    $region10: #{tpu_custom_call.1} parent=1 // pred_check
      _
    $region11: #{tpu_custom_call.1} parent=1 // pred_check_branch
      %28 = sbr.rel (0) target = $region13
    $region12: #{tpu_custom_call.1} parent=1 // pred_region
      _
    $region13: #{tpu_custom_call.1} parent=1 // pred_fallthru
      _
    // Predicated region
    $region14: #{tpu_custom_call.1} parent=1 // pred_check
      _
    $region15: #{tpu_custom_call.1} parent=1 // pred_check_branch
      %30 = sbr.rel (0) target = $region17
    $region16: #{tpu_custom_call.1} parent=1 // pred_region
      %s32 = ssub.s32 1024, 1024
      %33 = vsyncadd [#allocation6], %s32
      %s34 = sshll.u32 [#allocation5], 4
      %s35 = int_to_ptr.vmem [resolvable:$true] %s34
      %40 = dma.hbm_to_vmem [thread:$0]  %s3, 1024, %s35, [#allocation6], 64, 64, 4
    $region17: #{tpu_custom_call.1} parent=1 // pred_fallthru
      _
    // Predicated region
    $region18: #{tpu_custom_call.1} parent=1 // pred_check
      _
    $region19: #{tpu_custom_call.1} parent=1 // pred_check_branch
      %42 = sbr.rel (0) target = $region21
    $region20: #{tpu_custom_call.1} parent=1 // pred_region
      _
    $region21: #{tpu_custom_call.1} parent=1 // pred_fallthru
      _
    // Predicated region
    $region22: #{tpu_custom_call.1} parent=1 // pred_check
      _
    $region23: #{tpu_custom_call.1} parent=1 // pred_check_branch
      %44 = sbr.rel (0) target = $region25
    $region24: #{tpu_custom_call.1} parent=1 // pred_region
      %45 = dma.done [#allocation3], 256
    $region25: #{tpu_custom_call.1} parent=1 // pred_fallthru
      _
    // Predicated region
    $region26: #{tpu_custom_call.1} parent=1 // pred_check
      _
    $region27: #{tpu_custom_call.1} parent=1 // pred_check_branch
      %47 = sbr.rel (0) target = $region29
    $region28: #{tpu_custom_call.1} parent=1 // pred_region
      %48 = dma.done [#allocation6], 1024
    $region29: #{tpu_custom_call.1} parent=1 // pred_fallthru
      _
    %v50 = vld [vmem:[#allocation2] sm:$0xff]
    %v51 = vld [vmem:[#allocation2 + $0x8] sm:$0xff]
    %v52 = vld [vmem:[%s1] sm:$0x1]
    %v53 = vld [vmem:[%s2] sm:$0x1]
    %54 = vadd.xlane.f32.xlu0 %v50
    %v55 = vpop.xlane.xlu0 %54
    %56 = vadd.xlane.f32.xlu0 %v51
    %v57 = vpop.xlane.xlu0 %56
    %v58 = vrcp.pop 128.0
    %v59 = vmul.f32 %v55, %v58
    %v60 = vmul.f32 %v57, %v58
    %v61 = vsub.f32 %v50, %v59
    %v62 = vsub.f32 %v51, %v60
    %v63 = vmul.f32 %v61, %v61
    %v64 = vmul.f32 %v62, %v62
    %65 = vadd.xlane.f32.xlu0 %v63
    %v66 = vpop.xlane.xlu0 %65
    %67 = vadd.xlane.f32.xlu0 %v64
    %v68 = vpop.xlane.xlu0 %67
    %v69 = vmul.f32 %v66, %v58
    %v70 = vmul.f32 %v68, %v58
    %v71 = vadd.f32 %v69, 1e-05
    %v72 = vadd.f32 %v70, 1e-05
    %v73 = vrsqrt.pop %v71
    %v74 = vrsqrt.pop %v72
    %v76 = vlaneseq
    %v77 = vshrl.u32 %v76, 7
    %v78 = vsub.s32 0, %v77
    %v79 = vrot.slane %v52, %v78
    %v81 = vmul.f32 %v73, %v79
    %v82 = vmul.f32 %v74, %v79
    %v83 = vmul.f32 %v61, %v81
    %v84 = vmul.f32 %v62, %v82
    %v86 = vlaneseq
    %v87 = vshrl.u32 %v86, 7
    %v88 = vsub.s32 0, %v87
    %v89 = vrot.slane %v53, %v88
    %v91 = vadd.f32 %v83, %v89
    %v92 = vadd.f32 %v84, %v89
    %v93 = vpack.c.bf16 %v92, %v91
    %v94 = vld [vmem:[#allocation5] sm:$0xf]
    %v95 = vld [vmem:[#allocation5 + $0x4] sm:$0xf]
    %v96 = vld [vmem:[#allocation5 + $0x8] sm:$0xf]
    %v97 = vld [vmem:[#allocation5 + $0xc] sm:$0xf]
    %v98 = vld [vmem:[#allocation5 + $0x10] sm:$0xf]
    %v99 = vld [vmem:[#allocation5 + $0x14] sm:$0xf]
    %v100 = vld [vmem:[#allocation5 + $0x18] sm:$0xf]
    %v101 = vld [vmem:[#allocation5 + $0x1c] sm:$0xf]
    %v102 = vld [vmem:[#allocation5 + $0x20] sm:$0xf]
    %v103 = vld [vmem:[#allocation5 + $0x24] sm:$0xf]
    %v104 = vld [vmem:[#allocation5 + $0x28] sm:$0xf]
    %v105 = vld [vmem:[#allocation5 + $0x2c] sm:$0xf]
    %v106 = vld [vmem:[#allocation5 + $0x30] sm:$0xf]
    %v107 = vld [vmem:[#allocation5 + $0x34] sm:$0xf]
    %v108 = vld [vmem:[#allocation5 + $0x38] sm:$0xf]
    %v109 = vld [vmem:[#allocation5 + $0x3c] sm:$0xf]
    %v110 = vld [vmem:[%s4] sm:$0x1]
    %v112 = vlaneseq
    %v113 = vshrl.u32 %v112, 7
    %v114 = vsub.s32 0, %v113
    %v115 = vrot.slane %v110, %v114
    %v133 = vunpack.c.l.b16 %v94
    %v134 = vunpack.c.l.b16 %v95
    %v135 = vunpack.c.l.b16 %v96
    %v136 = vunpack.c.l.b16 %v97
    %v137 = vunpack.c.l.b16 %v98
    %v138 = vunpack.c.l.b16 %v99
    %v139 = vunpack.c.l.b16 %v100
    %v140 = vunpack.c.l.b16 %v101
    %v141 = vunpack.c.l.b16 %v102
    %v142 = vunpack.c.l.b16 %v103
    %v143 = vunpack.c.l.b16 %v104
    %v144 = vunpack.c.l.b16 %v105
    %v145 = vunpack.c.l.b16 %v106
    %v146 = vunpack.c.l.b16 %v107
    %v147 = vunpack.c.l.b16 %v108
    %v148 = vunpack.c.l.b16 %v109
    %v149 = vpack.c.b16 %v134, %v133
    %v150 = vpack.c.b16 %v136, %v135
    %v151 = vpack.c.b16 %v138, %v137
    %v152 = vpack.c.b16 %v140, %v139
    %v153 = vpack.c.b16 %v142, %v141
    %v154 = vpack.c.b16 %v144, %v143
    %v155 = vpack.c.b16 %v146, %v145
    %v156 = vpack.c.b16 %v148, %v147
    %165 = vmatprep.subr.bf16.mxu0 0
    %166 = vmatpush1.bf16.msra.mxu0 %v149
    %167 = vmatprep.subr.bf16.mxu0 0
    %168 = vmatpush1.bf16.msra.mxu0 %v150
    %169 = vmatprep.subr.bf16.mxu0 0
    %170 = vmatpush1.bf16.msra.mxu0 %v151
    %171 = vmatprep.subr.bf16.mxu0 0
    %172 = vmatpush1.bf16.msra.mxu0 %v152
    %173 = vmatprep.subr.bf16.mxu0 0
    %174 = vmatpush1.bf16.msra.mxu0 %v153
    %175 = vmatprep.subr.bf16.mxu0 0
    %176 = vmatpush1.bf16.msra.mxu0 %v154
    %177 = vmatprep.subr.bf16.mxu0 0
    %178 = vmatpush1.bf16.msra.mxu0 %v155
    %179 = vmatprep.subr.bf16.mxu0 0
    %180 = vmatpush1.bf16.msra.mxu0 %v156
    %181 = vmatprep.subr.bf16.mxu0 0
    %182 = vmatpush1.bf16.msra.mxu0 0
    %183 = vmatprep.subr.bf16.mxu0 0
    %184 = vmatpush1.bf16.msra.mxu0 0
    %185 = vmatprep.subr.bf16.mxu0 0
    %186 = vmatpush1.bf16.msra.mxu0 0
    %187 = vmatprep.subr.bf16.mxu0 0
    %188 = vmatpush1.bf16.msra.mxu0 0
    %189 = vmatprep.subr.bf16.mxu0 0
    %190 = vmatpush1.bf16.msra.mxu0 0
    %191 = vmatprep.subr.bf16.mxu0 0
    %192 = vmatpush1.bf16.msra.mxu0 0
    %193 = vmatprep.subr.bf16.mxu0 0
    %194 = vmatpush1.bf16.msra.mxu0 0
    %195 = vmatprep.subr.bf16.mxu0 0
    %196 = vmatpush1.bf16.msra.mxu0 0
    %197 = vmatprep.mubr.bf16.mxu0 0
    %198 = vmatmul.mubr.bf16.gmra.mrb[0].mxu0 %v93
    %v199 = vpop.f32.mrb[0].mxu0
    %v200 = vadd.f32 %v115, %v199
    %v201 = vpop.f32.mrb[0].mxu0
    %v202 = vpop.f32.mrb[0].mxu0
    %v203 = vadd.f32 %v115, %v202
    %v204 = vpop.f32.mrb[0].mxu0
    %205 = vdwg.mxu0
    %206 = vst [vmem:[#allocation7] sm:$0xff] %v200
    %207 = vst [vmem:[#allocation7 + $0x8] sm:$0xff] %v203
    // Predicated region
    $region30: #{tpu_custom_call.1} parent=1 // pred_check
      _
    $region31: #{tpu_custom_call.1} parent=1 // pred_check_branch
      %209 = sbr.rel (0) target = $region33
    $region32: #{tpu_custom_call.1} parent=1 // pred_region
      %s211 = ssub.s32 256, 256
      %212 = vsyncadd [#allocation4], %s211
      %s213 = sshll.u32 [#allocation7], 4
      %s214 = int_to_ptr.vmem [resolvable:$true] %s213
      %219 = dma.vmem_to_hbm [thread:$0]  %s214, 256, %s5, [#allocation4], 128, 128, 8
    $region33: #{tpu_custom_call.1} parent=1 // pred_fallthru
      _
    // Predicated region
    $region34: #{tpu_custom_call.1} parent=1 // pred_check
      _
    $region35: #{tpu_custom_call.1} parent=1 // pred_check_branch
      %221 = sbr.rel (0) target = $region37
    $region36: #{tpu_custom_call.1} parent=1 // pred_region
      %222 = dma.done [#allocation4], 256
    $region37: #{tpu_custom_call.1} parent=1 // pred_fallthru
      _
    %223 = vsyncpa [#allocation3], 1
    %224 = vsyncpa [#allocation6], 1
    %225 = vsyncpa [#allocation4], 1

</llo_original>
